<compile_context>
chip_gen: v7x
topology: tpu7x:2x2x1
jax: 0.10.0
libtpu: 0.0.40
codegen_flags: <defaults>
</compile_context>

<pallas_src>
import math
import functools

import jax
import jax.numpy as jnp
from jax import lax
from jax.experimental import pallas as pl
from jax.experimental.pallas import tpu as pltpu


# (B, K) . (N, K) -> (B, N), contracting the last dims of both; no transpose.
_CONTRACT_LAST = (((1,), (1,)), ((), ()))


# ----------------------------- Pallas kernels ------------------------------

def _noisy_linear_train_kernel(x_ref, wmu_ref, wsig_ref, ein_ref, eout_ref,
                               b_ref, o_ref, acc_ref):
    k = pl.program_id(1)

    @pl.when(k == 0)
    def _():
        acc_ref[...] = jnp.zeros_like(acc_ref)

    x = x_ref[...]                                    # (B, tk)
    xs = x * ein_ref[...]                             # (B, tk): factorized input noise
    t_mu = lax.dot_general(x, wmu_ref[...], _CONTRACT_LAST,
                           preferred_element_type=jnp.float32)      # (B, tn)
    t_sig = lax.dot_general(xs, wsig_ref[...], _CONTRACT_LAST,
                            preferred_element_type=jnp.float32)     # (B, tn)
    acc_ref[...] += t_mu + t_sig * eout_ref[...]

    @pl.when(k == pl.num_programs(1) - 1)
    def _():
        o_ref[...] = (acc_ref[...] + b_ref[...]).astype(o_ref.dtype)


def _noisy_linear_eval_kernel(x_ref, wmu_ref, b_ref, o_ref, acc_ref):
    k = pl.program_id(1)

    @pl.when(k == 0)
    def _():
        acc_ref[...] = jnp.zeros_like(acc_ref)

    acc_ref[...] += lax.dot_general(x_ref[...], wmu_ref[...], _CONTRACT_LAST,
                                    preferred_element_type=jnp.float32)

    @pl.when(k == pl.num_programs(1) - 1)
    def _():
        o_ref[...] = (acc_ref[...] + b_ref[...]).astype(o_ref.dtype)


# ------------------------------- Wrapper ------------------------------------

def _choose_tile(dim, target):
    """Largest multiple of 128 that is <= target and divides dim; else full dim."""
    if dim <= target:
        return dim
    t = (target // 128) * 128
    while t >= 128:
        if dim % t == 0:
            return t
        t -= 128
    return dim


@functools.partial(jax.jit, static_argnames=("training",))
def noisy_linear_forward(x, params, training=True):
    """params: weight_mu (O,I), weight_sigma (O,I), weight_eps_in (I,),
    weight_eps_out (O,), bias_mu (O,), bias_sigma (O,), bias_epsilon (O,)."""
    B, in_dim = x.shape
    out_dim = params["weight_mu"].shape[0]

    tk = _choose_tile(in_dim, 512)    # reduction tile (K)
    tn = _choose_tile(out_dim, 256)   # output tile (N), lane-dense
    grid = (out_dim // tn, in_dim // tk)   # (N parallel, K arbitrary/last)

    x_spec = pl.BlockSpec((B, tk), lambda j, k: (0, k))
    w_spec = pl.BlockSpec((tn, tk), lambda j, k: (j, k))
    n_vec_spec = pl.BlockSpec((1, tn), lambda j, k: (0, j))
    k_vec_spec = pl.BlockSpec((1, tk), lambda j, k: (0, k))
    out_spec = pl.BlockSpec((B, tn), lambda j, k: (0, j))

    out_shape = jax.ShapeDtypeStruct((B, out_dim), jnp.float32)
    scratch = [pltpu.VMEM((B, tn), jnp.float32)]
    cparams = pltpu.CompilerParams(
        dimension_semantics=("parallel", "arbitrary"))

    if training:
        # Effective bias folded outside the kernel (O(out_dim) work).
        b_eff = (params["bias_mu"]
                 + params["bias_sigma"] * params["bias_epsilon"]).reshape(1, out_dim)
        ein = params["weight_eps_in"].reshape(1, in_dim)
        eout = params["weight_eps_out"].reshape(1, out_dim)

        cost = pl.CostEstimate(
            flops=4 * B * in_dim * out_dim,
            transcendentals=0,
            bytes_accessed=4 * (2 * out_dim * in_dim + B * in_dim + B * out_dim
                                + 2 * in_dim + 3 * out_dim))

        return pl.pallas_call(
            _noisy_linear_train_kernel,
            out_shape=out_shape,
            grid=grid,
            in_specs=[x_spec, w_spec, w_spec, k_vec_spec, n_vec_spec, n_vec_spec],
            out_specs=out_spec,
            scratch_shapes=scratch,
            compiler_params=cparams,
            cost_estimate=cost,
        )(x, params["weight_mu"], params["weight_sigma"], ein, eout, b_eff)
    else:
        bmu = params["bias_mu"].reshape(1, out_dim)
        cost = pl.CostEstimate(
            flops=2 * B * in_dim * out_dim,
            transcendentals=0,
            bytes_accessed=4 * (out_dim * in_dim + B * in_dim + B * out_dim
                                + out_dim))

        return pl.pallas_call(
            _noisy_linear_eval_kernel,
            out_shape=out_shape,
            grid=grid,
            in_specs=[x_spec, w_spec, n_vec_spec],
            out_specs=out_spec,
            scratch_shapes=scratch,
            compiler_params=cparams,
            cost_estimate=cost,
        )(x, params["weight_mu"], bmu)


# ------------------------- Parameter initialization -------------------------

def _scale_noise(key, size):
    # f(x) = sign(x) * sqrt(|x|) applied to standard normal samples
    x = jax.random.normal(key, (size,), dtype=jnp.float32)
    return jnp.sign(x) * jnp.sqrt(jnp.abs(x))


def init_noisy_linear(key, input_dim, output_dim, std_init=0.5):
    k_wmu, k_bmu, k_ein, k_eout, k_beps = jax.random.split(key, 5)
    mu_range = 1.0 / math.sqrt(input_dim)

    weight_mu = jax.random.uniform(k_wmu, (output_dim, input_dim),
                                   minval=-mu_range, maxval=mu_range,
                                   dtype=jnp.float32)
    weight_sigma = jnp.full((output_dim, input_dim),
                            std_init / math.sqrt(input_dim), dtype=jnp.float32)
    bias_mu = jax.random.uniform(k_bmu, (output_dim,),
                                 minval=-mu_range, maxval=mu_range,
                                 dtype=jnp.float32)
    bias_sigma = jnp.full((output_dim,),
                          std_init / math.sqrt(output_dim), dtype=jnp.float32)

    # reset_noise(): factorized Gaussian noise.  Only the factors are stored;
    # weight_epsilon = outer(eps_out, eps_in) is never materialized.
    weight_eps_in = _scale_noise(k_ein, input_dim)      # (in,)
    weight_eps_out = _scale_noise(k_eout, output_dim)   # (out,)
    bias_epsilon = _scale_noise(k_beps, output_dim)     # (out,), matches the module

    return {
        "weight_mu": weight_mu,
        "weight_sigma": weight_sigma,
        "weight_eps_in": weight_eps_in,
        "weight_eps_out": weight_eps_out,
        "bias_mu": bias_mu,
        "bias_sigma": bias_sigma,
        "bias_epsilon": bias_epsilon,
    }


# --------------------------------- Main -------------------------------------

def _reference(x, params, training):
    w_eps = jnp.outer(params["weight_eps_out"], params["weight_eps_in"])
    if training:
        w_eff = params["weight_mu"] + params["weight_sigma"] * w_eps
        b_eff = params["bias_mu"] + params["bias_sigma"] * params["bias_epsilon"]
        return x @ w_eff.T + b_eff
    return x @ params["weight_mu"].T + params["bias_mu"]


if __name__ == "__main__":
    key = jax.random.PRNGKey(0)

    # Config A: tiled path (grid = (2, 2) with tn=256, tk=512).
    # Config B: small dims exercise the full-block fallback (grid = (1, 1)).
    configs = [(8, 1024, 512), (4, 96, 48)]

    ok = True
    for i, (batch, input_dim, output_dim) in enumerate(configs):
        k_params, k_x = jax.random.split(jax.random.fold_in(key, i))
        params = init_noisy_linear(k_params, input_dim, output_dim, std_init=0.5)
        x = jax.random.normal(k_x, (batch, input_dim), dtype=jnp.float32)

        y_train = noisy_linear_forward(x, params, training=True)
        y_eval = noisy_linear_forward(x, params, training=False)
        jax.block_until_ready((y_train, y_eval))

        ref_train = _reference(x, params, True)
        ref_eval = _reference(x, params, False)
        ok &= bool(jnp.allclose(y_train, ref_train, atol=1e-4, rtol=1e-4))
        ok &= bool(jnp.allclose(y_eval, ref_eval, atol=1e-4, rtol=1e-4))

    assert ok
    print("KERNEL_OK")
</pallas_src>

<mosaic_0001>
module attributes {stable_mosaic.version = 11 : i64} {
  func.func @_noisy_linear_train_kernel(%arg0: i32, %arg1: i32, %arg2: memref<8x512xf32, #tpu.memory_space<vmem>>, %arg3: memref<256x512xf32, #tpu.memory_space<vmem>>, %arg4: memref<256x512xf32, #tpu.memory_space<vmem>>, %arg5: memref<1x512xf32, #tpu.memory_space<vmem>>, %arg6: memref<1x256xf32, #tpu.memory_space<vmem>>, %arg7: memref<1x256xf32, #tpu.memory_space<vmem>>, %arg8: memref<8x256xf32, #tpu.memory_space<vmem>>, %arg9: memref<8x256xf32, #tpu.memory_space<vmem>>) attributes {dimension_semantics = [#tpu.dimension_semantics<parallel>, #tpu.dimension_semantics<arbitrary>], iteration_bounds = array<i64: 2, 2>, scalar_prefetch = 0 : i64, scratch_operands = 1 : i64, tpu.core_type = #tpu.core_type<tc>, window_params = [{transform_indices = @transform_0, window_bounds = array<i64: 8, 512>}, {transform_indices = @transform_1, window_bounds = array<i64: 256, 512>}, {transform_indices = @transform_2, window_bounds = array<i64: 256, 512>}, {transform_indices = @transform_3, window_bounds = array<i64: 1, 512>}, {transform_indices = @transform_4, window_bounds = array<i64: 1, 256>}, {transform_indices = @transform_5, window_bounds = array<i64: 1, 256>}, {transform_indices = @transform_6, window_bounds = array<i64: 8, 256>}]} {
    %c0_i32 = arith.constant 0 : i32
    %0 = arith.cmpi eq, %arg1, %c0_i32 : i32
    %1 = arith.extui %0 : i1 to i32
    %c0_i32_0 = arith.constant 0 : i32
    %2 = arith.cmpi ne, %1, %c0_i32_0 : i32
    scf.if %2 {
      %cst_16 = arith.constant 0.000000e+00 : f32
      %21 = vector.broadcast %cst_16 : f32 to vector<8x256xf32>
      %c0_17 = arith.constant 0 : index
      %c0_18 = arith.constant 0 : index
      %22 = vector.load %arg9[%c0_17, %c0_18] : memref<8x256xf32, #tpu.memory_space<vmem>>, vector<8x256xf32>
      tpu.vector_store %arg9[%c0_17, %c0_18], %21 {strides = array<i32>} : memref<8x256xf32, #tpu.memory_space<vmem>>, vector<8x256xf32>,
    } else {
    }
    %c0 = arith.constant 0 : index
    %c0_1 = arith.constant 0 : index
    %3 = vector.load %arg2[%c0, %c0_1] : memref<8x512xf32, #tpu.memory_space<vmem>>, vector<8x512xf32>
    %c0_2 = arith.constant 0 : index
    %c0_3 = arith.constant 0 : index
    %4 = vector.load %arg5[%c0_2, %c0_3] : memref<1x512xf32, #tpu.memory_space<vmem>>, vector<1x512xf32>
    %5 = vector.broadcast %4 : vector<1x512xf32> to vector<8x512xf32>
    %6 = arith.mulf %3, %5 : vector<8x512xf32>
    %c0_4 = arith.constant 0 : index
    %c0_5 = arith.constant 0 : index
    %7 = vector.load %arg3[%c0_4, %c0_5] : memref<256x512xf32, #tpu.memory_space<vmem>>, vector<256x512xf32>
    %cst = arith.constant dense<0.000000e+00> : vector<8x256xf32>
    %8 = tpu.matmul %3, %7, %cst {dimension_numbers = #tpu.dot_dimension_numbers<[1], [1], [0], [0], [0, 0, 1, 0], [], []>} : vector<8x512xf32>, vector<256x512xf32>, vector<8x256xf32> -> vector<8x256xf32>
    %c0_6 = arith.constant 0 : index
    %c0_7 = arith.constant 0 : index
    %9 = vector.load %arg4[%c0_6, %c0_7] : memref<256x512xf32, #tpu.memory_space<vmem>>, vector<256x512xf32>
    %cst_8 = arith.constant dense<0.000000e+00> : vector<8x256xf32>
    %10 = tpu.matmul %6, %9, %cst_8 {dimension_numbers = #tpu.dot_dimension_numbers<[1], [1], [0], [0], [0, 0, 1, 0], [], []>} : vector<8x512xf32>, vector<256x512xf32>, vector<8x256xf32> -> vector<8x256xf32>
    %c0_9 = arith.constant 0 : index
    %c0_10 = arith.constant 0 : index
    %11 = vector.load %arg9[%c0_9, %c0_10] : memref<8x256xf32, #tpu.memory_space<vmem>>, vector<8x256xf32>
    %c0_11 = arith.constant 0 : index
    %c0_12 = arith.constant 0 : index
    %12 = vector.load %arg6[%c0_11, %c0_12] : memref<1x256xf32, #tpu.memory_space<vmem>>, vector<1x256xf32>
    %13 = vector.broadcast %12 : vector<1x256xf32> to vector<8x256xf32>
    %14 = arith.mulf %10, %13 : vector<8x256xf32>
    %15 = arith.addf %8, %14 : vector<8x256xf32>
    %16 = arith.addf %11, %15 : vector<8x256xf32>
    %c0_13 = arith.constant 0 : index
    %c0_14 = arith.constant 0 : index
    %17 = vector.load %arg9[%c0_13, %c0_14] : memref<8x256xf32, #tpu.memory_space<vmem>>, vector<8x256xf32>
    tpu.vector_store %arg9[%c0_13, %c0_14], %16 {strides = array<i32>} : memref<8x256xf32, #tpu.memory_space<vmem>>, vector<8x256xf32>,
    %c1_i32 = arith.constant 1 : i32
    %18 = arith.cmpi eq, %arg1, %c1_i32 : i32
    %19 = arith.extui %18 : i1 to i32
    %c0_i32_15 = arith.constant 0 : i32
    %20 = arith.cmpi ne, %19, %c0_i32_15 : i32
    scf.if %20 {
      %c0_16 = arith.constant 0 : index
      %c0_17 = arith.constant 0 : index
      %21 = vector.load %arg9[%c0_16, %c0_17] : memref<8x256xf32, #tpu.memory_space<vmem>>, vector<8x256xf32>
      %c0_18 = arith.constant 0 : index
      %c0_19 = arith.constant 0 : index
      %22 = vector.load %arg7[%c0_18, %c0_19] : memref<1x256xf32, #tpu.memory_space<vmem>>, vector<1x256xf32>
      %23 = vector.broadcast %22 : vector<1x256xf32> to vector<8x256xf32>
      %24 = arith.addf %21, %23 : vector<8x256xf32>
      %c0_20 = arith.constant 0 : index
      %c0_21 = arith.constant 0 : index
      %25 = vector.load %arg8[%c0_20, %c0_21] : memref<8x256xf32, #tpu.memory_space<vmem>>, vector<8x256xf32>
      tpu.vector_store %arg8[%c0_20, %c0_21], %24 {strides = array<i32>} : memref<8x256xf32, #tpu.memory_space<vmem>>, vector<8x256xf32>,
    } else {
    }
    return
  }
  func.func @transform_0(%arg0: i32, %arg1: i32) -> (i32, i32) {
    %c0_i32 = arith.constant 0 : i32
    %c0_i32_0 = arith.constant 0 : i32
    return %c0_i32, %arg1 : i32, i32
  }
  func.func @transform_1(%arg0: i32, %arg1: i32) -> (i32, i32) {
    %c0_i32 = arith.constant 0 : i32
    return %arg0, %arg1 : i32, i32
  }
  func.func @transform_2(%arg0: i32, %arg1: i32) -> (i32, i32) {
    %c0_i32 = arith.constant 0 : i32
    return %arg0, %arg1 : i32, i32
  }
  func.func @transform_3(%arg0: i32, %arg1: i32) -> (i32, i32) {
    %c0_i32 = arith.constant 0 : i32
    %c0_i32_0 = arith.constant 0 : i32
    return %c0_i32, %arg1 : i32, i32
  }
  func.func @transform_4(%arg0: i32, %arg1: i32) -> (i32, i32) {
    %c0_i32 = arith.constant 0 : i32
    %c0_i32_0 = arith.constant 0 : i32
    return %c0_i32, %arg0 : i32, i32
  }
  func.func @transform_5(%arg0: i32, %arg1: i32) -> (i32, i32) {
    %c0_i32 = arith.constant 0 : i32
    %c0_i32_0 = arith.constant 0 : i32
    return %c0_i32, %arg0 : i32, i32
  }
  func.func @transform_6(%arg0: i32, %arg1: i32) -> (i32, i32) {
    %c0_i32 = arith.constant 0 : i32
    %c0_i32_0 = arith.constant 0 : i32
    return %c0_i32, %arg0 : i32, i32
  }
}

</mosaic_0001>

<llo_original>
// kernel: noisy_linear_forward.1
$region0: #{noisy_linear_forward.1}
  #allocation0 [shape = 'u32[]', space=smem, size = 0x4, offset = 0x4, fixed_abs, tag = 'smem constant byte address 0x4 - core index']
  #allocation1 [shape = 'u32[144,128]{1,0:T(1,128)}', space=vmem, size = 0x12000, scoped, tag = 'internal scratch']
  #allocation2 [shape = 'f32[8,256]{1,0:T(8,128)}', space=vmem, size = 0x2000, scoped, tag = 'scratch operand']
  %s0 = inlined_call_operand.hbm [shape: f32[8,1024], index: 0, kind: input, shape index: {}]
  %s1 = inlined_call_operand.hbm [shape: f32[512,1024], index: 1, kind: input, shape index: {}]
  %s2 = inlined_call_operand.hbm [shape: f32[512,1024], index: 2, kind: input, shape index: {}]
  %s3 = inlined_call_operand.hbm [shape: f32[1,1024], index: 3, kind: input, shape index: {}]
  %s4 = inlined_call_operand.hbm [shape: f32[1,512], index: 4, kind: input, shape index: {}]
  %s5 = inlined_call_operand.vmem [shape: f32[1,512], index: 5, kind: input, shape index: {}]
  %s6 = inlined_call_operand.hbm [shape: f32[8,512], index: 6, kind: output, shape index: {}]
  %s7 = sld [smem:[#allocation0]]
  $region85: #{noisy_linear_forward.1} parent=0
    _
  %s9 = ssub.s32 1, %s7
  %s10 = scalar_select 0, %s9, %s7
  $region1: #{noisy_linear_forward.1} parent=0
    #allocation3 [shape = 'u8[32768]{0}', space=vmem, size = 0x8000, scoped, tag = 'input window, operand 0']
    #allocation4 [shape = 's32[2]{0}', space=sflag, size = 0x8, scoped, tag = 'scoped memory for noisy_linear_forward.1']
    #allocation5 [shape = 's32[2]{0}', space=sflag, size = 0x8, scoped, tag = 'scoped memory for noisy_linear_forward.1']
    #allocation6 [shape = 'u8[1048576]{0}', space=vmem, size = 0x100000, scoped, tag = 'input window, operand 1']
    #allocation7 [shape = 's32[2]{0}', space=sflag, size = 0x8, scoped, tag = 'scoped memory for noisy_linear_forward.1']
    #allocation8 [shape = 'u8[1048576]{0}', space=vmem, size = 0x100000, scoped, tag = 'input window, operand 2']
    #allocation9 [shape = 'u8[4096]{0}', space=vmem, size = 0x1000, scoped, tag = 'input window, operand 3']
    #allocation10 [shape = 's32[2]{0}', space=sflag, size = 0x8, scoped, tag = 'scoped memory for noisy_linear_forward.1']
    #allocation11 [shape = 'u8[2048]{0}', space=vmem, size = 0x800, scoped, tag = 'input window, operand 4']
    #allocation12 [shape = 'u8[16384]{0}', space=vmem, size = 0x4000, scoped, tag = 'output window, operand 0']
    %11 = vsyncpa [#allocation4], 0
    %s12 = scalar_lea.sflag [#allocation4], 1
    %13 = vsyncpa %s12, 0
    %14 = vsyncpa [#allocation7], 0
    %s15 = scalar_lea.sflag [#allocation7], 1
    %16 = vsyncpa %s15, 0
    %17 = vsyncpa [#allocation10], 0
    %s18 = scalar_lea.sflag [#allocation10], 1
    %19 = vsyncpa %s18, 0
    %20 = vsyncpa [#allocation5], 0
    %s21 = scalar_lea.sflag [#allocation5], 1
    %22 = vsyncpa %s21, 0
    loop: start=0, step=1, limit=6
    $region2: #{noisy_linear_forward.1} parent=1 // loop_pre_header
      _
    $region3: #{noisy_linear_forward.1} parent=1 // loop_header
      %s24 = sphi 0, %s28
      %p25 = scmp.ge.s32.totalorder %s24, 6
      %s31 = sphi 0, %s43
      %s32 = sphi 0, %s39
      %s33 = sphi 0, %s31
      %s34 = sphi 0, %s32
      %s35 = sphi 0, %s33
      %s36 = sphi 0, %s34
      %s46 = sphi 0, %s48
      %s49 = sphi 0, %s46
      %s50 = sphi 0, %s49
      %s66 = sphi 0, %s50
      %s74 = sphi 0, %s76
      %s77 = sphi 0, %s74
      %s78 = sphi 0, %s77
      %s94 = sphi 0, %s78
      %s102 = sphi 0, %s104
      %s105 = sphi 0, %s102
      %s106 = sphi 0, %s105
      %s122 = sphi 0, %s106
      %s128 = sphi 0, %s130
      %s131 = sphi 0, %s128
      %s132 = sphi 0, %s131
      %s148 = sphi 0, %s132
      %s154 = sphi 0, %s156
      %s157 = sphi 0, %s154
      %s158 = sphi 0, %s157
      %s174 = sphi 0, %s158
      %s180 = sphi 0, %s182
      %s183 = sphi 0, %s180
      %s184 = sphi 0, %s183
      %s200 = sphi 0, %s184
      %s206 = sphi 0, %s208
      %s209 = sphi 0, %s206
      %s210 = sphi 0, %s209
      %s226 = sphi 0, %s210
    $region4: #{noisy_linear_forward.1} parent=1 // loop_header_branch
      %27 = sbr.rel (%p25) target = $region8
    $region5: #{noisy_linear_forward.1} parent=1 // loop_body
      %s29 = ssub.s32 %s24, 1
      %s30 = ssub.s32 %s24, 2
      %s37 = sadd.s32 1, %s32
      %p38 = scmp.ge.s32.totalorder %s37, 2
      %s39 = scalar_select %p38, 0, %s37
      %s40 = sadd.s32 1, %s31
      %s41 = scalar_select %p38, %s40, %s31
      %p42 = scmp.ge.s32.totalorder %s41, 2
      %s43 = scalar_select %p42, 0, %s41
      %s44 = ssub.s32 %s32, %s39
      %p45 = scmp.eq.s32.totalorder %s44, 0
      %s47 = sadd.s32 %s46, 1
      %s48 = scalar_select %p45, %s46, %s47
      %p51 = pneg %p45
      %p52 = scmp.eq.s32.totalorder %s24, 3
      %p53 = por %p51, %p52
      %p54 = scmp.ne.s32.totalorder %s46, %s49
      %p55 = scmp.eq.s32.totalorder %s24, 0
      %p56 = por %p54, %p55
      %p57 = scmp.ne.s32.totalorder %s46, %s49
      %p58 = scmp.eq.s32.totalorder %s29, 3
      %p59 = por %p57, %p58
      %p60 = scmp.ne.s32.totalorder %s49, %s50
      %p61 = scmp.eq.s32.totalorder %s29, 0
      %p62 = por %p60, %p61
      %p63 = scmp.ne.s32.totalorder %s49, %s50
      %p64 = scmp.eq.s32.totalorder %s30, 3
      %p65 = por %p63, %p64
      %p67 = scmp.ne.s32.totalorder %s50, %s66
      %p68 = scmp.eq.s32.totalorder %s30, 0
      %p69 = por %p67, %p68
      %s70 = ssub.s32 %s31, %s43
      %s71 = ssub.s32 %s32, %s39
      %s72 = sor.u32 %s70, %s71
      %p73 = scmp.eq.s32.totalorder %s72, 0
      %s75 = sadd.s32 %s74, 1
      %s76 = scalar_select %p73, %s74, %s75
      %p79 = pneg %p73
      %p80 = scmp.eq.s32.totalorder %s24, 3
      %p81 = por %p79, %p80
      %p82 = scmp.ne.s32.totalorder %s74, %s77
      %p83 = scmp.eq.s32.totalorder %s24, 0
      %p84 = por %p82, %p83
      %p85 = scmp.ne.s32.totalorder %s74, %s77
      %p86 = scmp.eq.s32.totalorder %s29, 3
      %p87 = por %p85, %p86
      %p88 = scmp.ne.s32.totalorder %s77, %s78
      %p89 = scmp.eq.s32.totalorder %s29, 0
      %p90 = por %p88, %p89
      %p91 = scmp.ne.s32.totalorder %s77, %s78
      %p92 = scmp.eq.s32.totalorder %s30, 3
      %p93 = por %p91, %p92
      %p95 = scmp.ne.s32.totalorder %s78, %s94
      %p96 = scmp.eq.s32.totalorder %s30, 0
      %p97 = por %p95, %p96
      %s98 = ssub.s32 %s31, %s43
      %s99 = ssub.s32 %s32, %s39
      %s100 = sor.u32 %s98, %s99
      %p101 = scmp.eq.s32.totalorder %s100, 0
      %s103 = sadd.s32 %s102, 1
      %s104 = scalar_select %p101, %s102, %s103
      %p107 = pneg %p101
      %p108 = scmp.eq.s32.totalorder %s24, 3
      %p109 = por %p107, %p108
      %p110 = scmp.ne.s32.totalorder %s102, %s105
      %p111 = scmp.eq.s32.totalorder %s24, 0
      %p112 = por %p110, %p111
      %p113 = scmp.ne.s32.totalorder %s102, %s105
      %p114 = scmp.eq.s32.totalorder %s29, 3
      %p115 = por %p113, %p114
      %p116 = scmp.ne.s32.totalorder %s105, %s106
      %p117 = scmp.eq.s32.totalorder %s29, 0
      %p118 = por %p116, %p117
      %p119 = scmp.ne.s32.totalorder %s105, %s106
      %p120 = scmp.eq.s32.totalorder %s30, 3
      %p121 = por %p119, %p120
      %p123 = scmp.ne.s32.totalorder %s106, %s122
      %p124 = scmp.eq.s32.totalorder %s30, 0
      %p125 = por %p123, %p124
      %s126 = ssub.s32 %s32, %s39
      %p127 = scmp.eq.s32.totalorder %s126, 0
      %s129 = sadd.s32 %s128, 1
      %s130 = scalar_select %p127, %s128, %s129
      %p133 = pneg %p127
      %p134 = scmp.eq.s32.totalorder %s24, 3
      %p135 = por %p133, %p134
      %p136 = scmp.ne.s32.totalorder %s128, %s131
      %p137 = scmp.eq.s32.totalorder %s24, 0
      %p138 = por %p136, %p137
      %p139 = scmp.ne.s32.totalorder %s128, %s131
      %p140 = scmp.eq.s32.totalorder %s29, 3
      %p141 = por %p139, %p140
      %p142 = scmp.ne.s32.totalorder %s131, %s132
      %p143 = scmp.eq.s32.totalorder %s29, 0
      %p144 = por %p142, %p143
      %p145 = scmp.ne.s32.totalorder %s131, %s132
      %p146 = scmp.eq.s32.totalorder %s30, 3
      %p147 = por %p145, %p146
      %p149 = scmp.ne.s32.totalorder %s132, %s148
      %p150 = scmp.eq.s32.totalorder %s30, 0
      %p151 = por %p149, %p150
      %s152 = ssub.s32 %s31, %s43
      %p153 = scmp.eq.s32.totalorder %s152, 0
      %s155 = sadd.s32 %s154, 1
      %s156 = scalar_select %p153, %s154, %s155
      %p159 = pneg %p153
      %p160 = scmp.eq.s32.totalorder %s24, 3
      %p161 = por %p159, %p160
      %p162 = scmp.ne.s32.totalorder %s154, %s157
      %p163 = scmp.eq.s32.totalorder %s24, 0
      %p164 = por %p162, %p163
      %p165 = scmp.ne.s32.totalorder %s154, %s157
      %p166 = scmp.eq.s32.totalorder %s29, 3
      %p167 = por %p165, %p166
      %p168 = scmp.ne.s32.totalorder %s157, %s158
      %p169 = scmp.eq.s32.totalorder %s29, 0
      %p170 = por %p168, %p169
      %p171 = scmp.ne.s32.totalorder %s157, %s158
      %p172 = scmp.eq.s32.totalorder %s30, 3
      %p173 = por %p171, %p172
      %p175 = scmp.ne.s32.totalorder %s158, %s174
      %p176 = scmp.eq.s32.totalorder %s30, 0
      %p177 = por %p175, %p176
      %s178 = ssub.s32 %s31, %s43
      %p179 = scmp.eq.s32.totalorder %s178, 0
      %s181 = sadd.s32 %s180, 1
      %s182 = scalar_select %p179, %s180, %s181
      %p185 = pneg %p179
      %p186 = scmp.eq.s32.totalorder %s24, 3
      %p187 = por %p185, %p186
      %p188 = scmp.ne.s32.totalorder %s180, %s183
      %p189 = scmp.eq.s32.totalorder %s24, 0
      %p190 = por %p188, %p189
      %p191 = scmp.ne.s32.totalorder %s180, %s183
      %p192 = scmp.eq.s32.totalorder %s29, 3
      %p193 = por %p191, %p192
      %p194 = scmp.ne.s32.totalorder %s183, %s184
      %p195 = scmp.eq.s32.totalorder %s29, 0
      %p196 = por %p194, %p195
      %p197 = scmp.ne.s32.totalorder %s183, %s184
      %p198 = scmp.eq.s32.totalorder %s30, 3
      %p199 = por %p197, %p198
      %p201 = scmp.ne.s32.totalorder %s184, %s200
      %p202 = scmp.eq.s32.totalorder %s30, 0
      %p203 = por %p201, %p202
      %s204 = ssub.s32 %s31, %s43
      %p205 = scmp.eq.s32.totalorder %s204, 0
      %s207 = sadd.s32 %s206, 1
      %s208 = scalar_select %p205, %s206, %s207
      %p211 = pneg %p205
      %p212 = scmp.eq.s32.totalorder %s24, 3
      %p213 = por %p211, %p212
      %p214 = scmp.ne.s32.totalorder %s206, %s209
      %p215 = scmp.eq.s32.totalorder %s24, 0
      %p216 = por %p214, %p215
      %p217 = scmp.ne.s32.totalorder %s206, %s209
      %p218 = scmp.eq.s32.totalorder %s29, 3
      %p219 = por %p217, %p218
      %p220 = scmp.ne.s32.totalorder %s209, %s210
      %p221 = scmp.eq.s32.totalorder %s29, 0
      %p222 = por %p220, %p221
      %p223 = scmp.ne.s32.totalorder %s209, %s210
      %p224 = scmp.eq.s32.totalorder %s30, 3
      %p225 = por %p223, %p224
      %p227 = scmp.ne.s32.totalorder %s210, %s226
      %p228 = scmp.eq.s32.totalorder %s30, 0
      %p229 = por %p227, %p228
      %p230 = scmp.le.s32.totalorder 1, %s24
      %p231 = scmp.lt.s32.totalorder %s24, 5
      %p232 = pnand %p230, %p231
      %p233 = pneg %p232
      // Predicated region
      $region9: #{noisy_linear_forward.1} parent=5 // pred_check
        _
      $region10: #{noisy_linear_forward.1} parent=5 // pred_check_branch
        %235 = sbr.rel (%p232) target = $region12
      $region11: #{noisy_linear_forward.1} parent=5 // pred_region
        %s236 = ssub.s32 %s24, 1
      $region12: #{noisy_linear_forward.1} parent=5 // pred_fallthru
        _
      %p237 = scmp.lt.s32.totalorder %s24, 4
      // Predicated region
      $region13: #{noisy_linear_forward.1} parent=5 // pred_check
        %p238 = pneg %p237
      $region14: #{noisy_linear_forward.1} parent=5 // pred_check_branch
        %240 = sbr.rel (%p238) target = $region16
      $region15: #{noisy_linear_forward.1} parent=5 // pred_region
        // Predicated region
        $region17: #{noisy_linear_forward.1} parent=15 // pred_check
          %p241 = pneg %p56
        $region18: #{noisy_linear_forward.1} parent=15 // pred_check_branch
          %243 = sbr.rel (%p241) target = $region20
        $region19: #{noisy_linear_forward.1} parent=15 // pred_region
          %s244 = sand.u32 %s46, 1
          %s245 = scalar_lea.sflag [#allocation4], %s244
          %s246 = sand.u32 %s46, 1
          %s247 = smul.addr %s246, 32
          %s248 = scalar_lea.vmem [#allocation3], %s247
          %s249 = smul.u32 4, %s32
          %s251 = ssub.s32 512, 512
          %252 = vsyncadd %s245, %s251
          %s253 = smul.addr %s249, 128
          %s254 = scalar_lea.hbm %s0, %s253
          %s256 = sshll.u32 %s248, 4
          %s257 = int_to_ptr.vmem [resolvable:$true] %s256
          %259 = dma.hbm_to_vmem [thread:$0]  %s254, 512, %s257, %s245
        $region20: #{noisy_linear_forward.1} parent=15 // pred_fallthru
          _
        // Predicated region
        $region21: #{noisy_linear_forward.1} parent=15 // pred_check
          %p260 = pneg %p84
        $region22: #{noisy_linear_forward.1} parent=15 // pred_check_branch
          %262 = sbr.rel (%p260) target = $region24
        $region23: #{noisy_linear_forward.1} parent=15 // pred_region
          %s263 = sand.u32 %s24, 1
          %s264 = scalar_lea.sflag [#allocation7], %s263
          %s265 = sand.u32 %s74, 1
          %s266 = smul.addr %s265, 1024
          %s267 = scalar_lea.vmem [#allocation6], %s266
          %s268 = smul.u32 32, %s31
          %s269 = smul.u32 4, %s32
          %s271 = ssub.s32 16384, 16384
          %272 = vsyncadd %s264, %s271
          %s273 = smul.addr %s268, 8
          %s274 = sadd.s32 %s269, %s273
          %s275 = smul.addr %s274, 128
          %s276 = scalar_lea.hbm %s1, %s275
          %s277 = sshll.u32 %s267, 4
          %s278 = int_to_ptr.vmem [resolvable:$true] %s277
          %283 = dma.hbm_to_vmem [thread:$0]  %s276, 16384, %s278, %s264, 1024, 512, 32
        $region24: #{noisy_linear_forward.1} parent=15 // pred_fallthru
          _
        // Predicated region
        $region25: #{noisy_linear_forward.1} parent=15 // pred_check
          %p284 = pneg %p112
        $region26: #{noisy_linear_forward.1} parent=15 // pred_check_branch
          %286 = sbr.rel (%p284) target = $region28
        $region27: #{noisy_linear_forward.1} parent=15 // pred_region
          %s287 = sand.u32 %s24, 1
          %s288 = scalar_lea.sflag [#allocation7], %s287
          %s289 = sand.u32 %s102, 1
          %s290 = smul.addr %s289, 1024
          %s291 = scalar_lea.vmem [#allocation8], %s290
          %s292 = smul.u32 32, %s31
          %s293 = smul.u32 4, %s32
          %s295 = ssub.s32 16384, 16384
          %296 = vsyncadd %s288, %s295
          %s297 = smul.addr %s292, 8
          %s298 = sadd.s32 %s293, %s297
          %s299 = smul.addr %s298, 128
          %s300 = scalar_lea.hbm %s2, %s299
          %s301 = sshll.u32 %s291, 4
          %s302 = int_to_ptr.vmem [resolvable:$true] %s301
          %307 = dma.hbm_to_vmem [thread:$0]  %s300, 16384, %s302, %s288, 1024, 512, 32
        $region28: #{noisy_linear_forward.1} parent=15 // pred_fallthru
          _
        // Predicated region
        $region29: #{noisy_linear_forward.1} parent=15 // pred_check
          %p308 = pneg %p138
        $region30: #{noisy_linear_forward.1} parent=15 // pred_check_branch
          %310 = sbr.rel (%p308) target = $region32
        $region31: #{noisy_linear_forward.1} parent=15 // pred_region
          %s311 = sand.u32 %s24, 1
          %s312 = scalar_lea.sflag [#allocation10], %s311
          %s313 = sand.u32 %s128, 1
          %s314 = smul.addr %s313, 4
          %s315 = scalar_lea.vmem [#allocation9], %s314
          %s316 = smul.u32 4, %s32
          %s318 = ssub.s32 64, 64
          %319 = vsyncadd %s312, %s318
          %s320 = smul.addr %s316, 16
          %s321 = scalar_lea.hbm %s3, %s320
          %s323 = sshll.u32 %s315, 4
          %s324 = int_to_ptr.vmem [resolvable:$true] %s323
          %326 = dma.hbm_to_vmem [thread:$0]  %s321, 64, %s324, %s312
        $region32: #{noisy_linear_forward.1} parent=15 // pred_fallthru
          _
        // Predicated region
        $region33: #{noisy_linear_forward.1} parent=15 // pred_check
          %p327 = pneg %p164
        $region34: #{noisy_linear_forward.1} parent=15 // pred_check_branch
          %329 = sbr.rel (%p327) target = $region36
        $region35: #{noisy_linear_forward.1} parent=15 // pred_region
          %s330 = sand.u32 %s24, 1
          %s331 = scalar_lea.sflag [#allocation10], %s330
          %s332 = sand.u32 %s154, 1
          %s333 = smul.addr %s332, 2
          %s334 = scalar_lea.vmem [#allocation11], %s333
          %s335 = smul.u32 2, %s31
          %s337 = ssub.s32 32, 32
          %338 = vsyncadd %s331, %s337
          %s339 = smul.addr %s335, 16
          %s340 = scalar_lea.hbm %s4, %s339
          %s342 = sshll.u32 %s334, 4
          %s343 = int_to_ptr.vmem [resolvable:$true] %s342
          %345 = dma.hbm_to_vmem [thread:$0]  %s340, 32, %s343, %s331
        $region36: #{noisy_linear_forward.1} parent=15 // pred_fallthru
          _
        // Predicated region
        $region37: #{noisy_linear_forward.1} parent=15 // pred_check
          %p346 = pneg %p190
        $region38: #{noisy_linear_forward.1} parent=15 // pred_check_branch
          %348 = sbr.rel (%p346) target = $region40
        $region39: #{noisy_linear_forward.1} parent=15 // pred_region
          %s349 = smul.u32 2, %s31
          %p350 = scmp.lt.s32.totalorder %s349, 3
          %s351 = scalar_select %p350, %s349, 3
          %s352 = scalar_lea.vmem %s5, %s351
          %s353 = smul.u32 2, %s31
        $region40: #{noisy_linear_forward.1} parent=15 // pred_fallthru
          _
      $region16: #{noisy_linear_forward.1} parent=5 // pred_fallthru
        _
      %p354 = scmp.le.s32.totalorder 1, %s24
      %p355 = scmp.lt.s32.totalorder %s24, 5
      %p356 = pnand %p354, %p355
      %p357 = pneg %p356
      // Predicated region
      $region41: #{noisy_linear_forward.1} parent=5 // pred_check
        _
      $region42: #{noisy_linear_forward.1} parent=5 // pred_check_branch
        %359 = sbr.rel (%p356) target = $region44
      $region43: #{noisy_linear_forward.1} parent=5 // pred_region
        %s360 = ssub.s32 %s24, 1
        %s361 = sand.u32 %s49, 1
        %s362 = scalar_lea.sflag [#allocation4], %s361
        %s363 = sand.u32 %s49, 1
        %s364 = smul.addr %s363, 32
        %s365 = scalar_lea.vmem [#allocation3], %s364
        // Predicated region
        $region45: #{noisy_linear_forward.1} parent=43 // pred_check
          %p366 = pneg %p62
        $region46: #{noisy_linear_forward.1} parent=43 // pred_check_branch
          %368 = sbr.rel (%p366) target = $region48
        $region47: #{noisy_linear_forward.1} parent=43 // pred_region
          %369 = dma.done %s362, 512
        $region48: #{noisy_linear_forward.1} parent=43 // pred_fallthru
          _
        %s370 = sand.u32 %s29, 1
        %s371 = scalar_lea.sflag [#allocation7], %s370
        %s372 = sand.u32 %s77, 1
        %s373 = smul.addr %s372, 1024
        %s374 = scalar_lea.vmem [#allocation6], %s373
        // Predicated region
        $region49: #{noisy_linear_forward.1} parent=43 // pred_check
          %p375 = pneg %p90
        $region50: #{noisy_linear_forward.1} parent=43 // pred_check_branch
          %377 = sbr.rel (%p375) target = $region52
        $region51: #{noisy_linear_forward.1} parent=43 // pred_region
          %378 = dma.done %s371, 16384
        $region52: #{noisy_linear_forward.1} parent=43 // pred_fallthru
          _
        %s379 = sand.u32 %s29, 1
        %s380 = scalar_lea.sflag [#allocation7], %s379
        %s381 = sand.u32 %s105, 1
        %s382 = smul.addr %s381, 1024
        %s383 = scalar_lea.vmem [#allocation8], %s382
        // Predicated region
        $region53: #{noisy_linear_forward.1} parent=43 // pred_check
          %p384 = pneg %p118
        $region54: #{noisy_linear_forward.1} parent=43 // pred_check_branch
          %386 = sbr.rel (%p384) target = $region56
        $region55: #{noisy_linear_forward.1} parent=43 // pred_region
          %387 = dma.done %s380, 16384
        $region56: #{noisy_linear_forward.1} parent=43 // pred_fallthru
          _
        %s388 = sand.u32 %s29, 1
        %s389 = scalar_lea.sflag [#allocation10], %s388
        %s390 = sand.u32 %s131, 1
        %s391 = smul.addr %s390, 4
        %s392 = scalar_lea.vmem [#allocation9], %s391
        // Predicated region
        $region57: #{noisy_linear_forward.1} parent=43 // pred_check
          %p393 = pneg %p144
        $region58: #{noisy_linear_forward.1} parent=43 // pred_check_branch
          %395 = sbr.rel (%p393) target = $region60
        $region59: #{noisy_linear_forward.1} parent=43 // pred_region
          %396 = dma.done %s389, 64
        $region60: #{noisy_linear_forward.1} parent=43 // pred_fallthru
          _
        %s397 = sand.u32 %s29, 1
        %s398 = scalar_lea.sflag [#allocation10], %s397
        %s399 = sand.u32 %s157, 1
        %s400 = smul.addr %s399, 2
        %s401 = scalar_lea.vmem [#allocation11], %s400
        // Predicated region
        $region61: #{noisy_linear_forward.1} parent=43 // pred_check
          %p402 = pneg %p170
        $region62: #{noisy_linear_forward.1} parent=43 // pred_check_branch
          %404 = sbr.rel (%p402) target = $region64
        $region63: #{noisy_linear_forward.1} parent=43 // pred_region
          %405 = dma.done %s398, 32
        $region64: #{noisy_linear_forward.1} parent=43 // pred_fallthru
          _
        %s406 = sand.u32 %s49, 1
        %s407 = scalar_lea.sflag [#allocation4], %s406
        %s408 = sand.u32 %s49, 1
        %s409 = smul.addr %s408, 32
        %s410 = scalar_lea.vmem [#allocation3], %s409
        %p411 = pneg %p62
        %p412 = pneg %p59
        %s413 = sand.u32 %s29, 1
        %s414 = scalar_lea.sflag [#allocation7], %s413
        %s415 = sand.u32 %s77, 1
        %s416 = smul.addr %s415, 1024
        %s417 = scalar_lea.vmem [#allocation6], %s416
        %p418 = pneg %p90
        %p419 = pneg %p87
        %s420 = sand.u32 %s29, 1
        %s421 = scalar_lea.sflag [#allocation7], %s420
        %s422 = sand.u32 %s105, 1
        %s423 = smul.addr %s422, 1024
        %s424 = scalar_lea.vmem [#allocation8], %s423
        %p425 = pneg %p118
        %p426 = pneg %p115
        %s427 = sand.u32 %s29, 1
        %s428 = scalar_lea.sflag [#allocation10], %s427
        %s429 = sand.u32 %s131, 1
        %s430 = smul.addr %s429, 4
        %s431 = scalar_lea.vmem [#allocation9], %s430
        %p432 = pneg %p144
        %p433 = pneg %p141
        %s434 = sand.u32 %s29, 1
        %s435 = scalar_lea.sflag [#allocation10], %s434
        %s436 = sand.u32 %s157, 1
        %s437 = smul.addr %s436, 2
        %s438 = scalar_lea.vmem [#allocation11], %s437
        %p439 = pneg %p170
        %p440 = pneg %p167
        %s441 = smul.u32 2, %s33
        %p442 = scmp.lt.s32.totalorder %s441, 3
        %s443 = scalar_select %p442, %s441, 3
        %s444 = scalar_lea.vmem %s5, %s443
        %p445 = pneg %p196
        %p446 = pneg %p193
        %p447 = pneg %p222
        %p448 = pneg %p219
        %s449 = sand.u32 %s209, 1
        %s450 = scalar_lea.sflag [#allocation5], %s449
        %s451 = sand.u32 %s209, 1
        %s452 = smul.addr %s451, 16
        %s453 = scalar_lea.vmem [#allocation12], %s452
        %s454 = smul.u32 4, %s34
        %s455 = smul.u32 32, %s33
        %s456 = smul.u32 4, %s34
        %s457 = smul.u32 32, %s33
        %s458 = smul.u32 4, %s34
        %s459 = smul.u32 4, %s34
        %s460 = smul.u32 2, %s33
        %s461 = smul.u32 2, %s33
        %p462 = scmp.lt.s32.totalorder %s461, 3
        %s463 = scalar_select %p462, %s461, 3
        %s464 = scalar_lea.vmem %s5, %s463
        %s465 = smul.u32 2, %s33
        %s466 = smul.u32 2, %s33
        %p467 = scmp.eq.s32.totalorder %s34, 0
        // Predicated region
        $region65: #{noisy_linear_forward.1} parent=43 // pred_check
          %p468 = pneg %p467
        $region66: #{noisy_linear_forward.1} parent=43 // pred_check_branch
          %470 = sbr.rel (%p468) target = $region68
        $region67: #{noisy_linear_forward.1} parent=43 // pred_region
          %471 = vst [vmem:[#allocation2] sm:$0xff] 0.0
          %472 = vst [vmem:[#allocation2 + $0x8] sm:$0xff] 0.0
        $region68: #{noisy_linear_forward.1} parent=43 // pred_fallthru
          _
        %v473 = vld [vmem:[%s365] sm:$0xff]
        %v474 = vld [vmem:[%s365 + $0x8] sm:$0xff]
        %v475 = vld [vmem:[%s365 + $0x10] sm:$0xff]
        %v476 = vld [vmem:[%s365 + $0x18] sm:$0xff]
        %v477 = vld [vmem:[%s392] sm:$0xf]
        %v479 = vlaneseq
        %v480 = vshrl.u32 %v479, 7
        %v481 = vsub.s32 0, %v480
        %v482 = vrot.slane %v477, %v481
        %v483 = vlaneseq
        %v484 = vshrl.u32 %v483, 7
        %v485 = vsub.s32 1, %v484
        %v486 = vrot.slane %v477, %v485
        %v487 = vlaneseq
        %v488 = vshrl.u32 %v487, 7
        %v489 = vsub.s32 2, %v488
        %v490 = vrot.slane %v477, %v489
        %v491 = vlaneseq
        %v492 = vshrl.u32 %v491, 7
        %v493 = vsub.s32 3, %v492
        %v494 = vrot.slane %v477, %v493
        %v499 = vmul.f32 %v473, %v482
        %v500 = vmul.f32 %v474, %v486
        %v501 = vmul.f32 %v475, %v490
        %v502 = vmul.f32 %v476, %v494
        %v503 = vld [vmem:[%s374] sm:$0xff]
        %v504 = vld [vmem:[%s374 + $0x8] sm:$0xff]
        %v505 = vld [vmem:[%s374 + $0x10] sm:$0xff]
        %v506 = vld [vmem:[%s374 + $0x18] sm:$0xff]
        %v507 = vld [vmem:[%s374 + $0x20] sm:$0xff]
        %v508 = vld [vmem:[%s374 + $0x28] sm:$0xff]
        %v509 = vld [vmem:[%s374 + $0x30] sm:$0xff]
        %v510 = vld [vmem:[%s374 + $0x38] sm:$0xff]
        %v511 = vld [vmem:[%s374 + $0x40] sm:$0xff]
        %v512 = vld [vmem:[%s374 + $0x48] sm:$0xff]
        %v513 = vld [vmem:[%s374 + $0x50] sm:$0xff]
        %v514 = vld [vmem:[%s374 + $0x58] sm:$0xff]
        %v515 = vld [vmem:[%s374 + $0x60] sm:$0xff]
        %v516 = vld [vmem:[%s374 + $0x68] sm:$0xff]
        %v517 = vld [vmem:[%s374 + $0x70] sm:$0xff]
        %v518 = vld [vmem:[%s374 + $0x78] sm:$0xff]
        %v519 = vld [vmem:[%s374 + $0x80] sm:$0xff]
        %v520 = vld [vmem:[%s374 + $0x88] sm:$0xff]
        %v521 = vld [vmem:[%s374 + $0x90] sm:$0xff]
        %v522 = vld [vmem:[%s374 + $0x98] sm:$0xff]
        %v523 = vld [vmem:[%s374 + $0xa0] sm:$0xff]
        %v524 = vld [vmem:[%s374 + $0xa8] sm:$0xff]
        %v525 = vld [vmem:[%s374 + $0xb0] sm:$0xff]
        %v526 = vld [vmem:[%s374 + $0xb8] sm:$0xff]
        %v527 = vld [vmem:[%s374 + $0xc0] sm:$0xff]
        %v528 = vld [vmem:[%s374 + $0xc8] sm:$0xff]
        %v529 = vld [vmem:[%s374 + $0xd0] sm:$0xff]
        %v530 = vld [vmem:[%s374 + $0xd8] sm:$0xff]
        %v531 = vld [vmem:[%s374 + $0xe0] sm:$0xff]
        %v532 = vld [vmem:[%s374 + $0xe8] sm:$0xff]
        %v533 = vld [vmem:[%s374 + $0xf0] sm:$0xff]
        %v534 = vld [vmem:[%s374 + $0xf8] sm:$0xff]
        %v535 = vld [vmem:[%s374 + $0x100] sm:$0xff]
        %v536 = vld [vmem:[%s374 + $0x108] sm:$0xff]
        %v537 = vld [vmem:[%s374 + $0x110] sm:$0xff]
        %v538 = vld [vmem:[%s374 + $0x118] sm:$0xff]
        %v539 = vld [vmem:[%s374 + $0x120] sm:$0xff]
        %v540 = vld [vmem:[%s374 + $0x128] sm:$0xff]
        %v541 = vld [vmem:[%s374 + $0x130] sm:$0xff]
        %v542 = vld [vmem:[%s374 + $0x138] sm:$0xff]
        %v543 = vld [vmem:[%s374 + $0x140] sm:$0xff]
        %v544 = vld [vmem:[%s374 + $0x148] sm:$0xff]
        %v545 = vld [vmem:[%s374 + $0x150] sm:$0xff]
        %v546 = vld [vmem:[%s374 + $0x158] sm:$0xff]
        %v547 = vld [vmem:[%s374 + $0x160] sm:$0xff]
        %v548 = vld [vmem:[%s374 + $0x168] sm:$0xff]
        %v549 = vld [vmem:[%s374 + $0x170] sm:$0xff]
        %v550 = vld [vmem:[%s374 + $0x178] sm:$0xff]
        %v551 = vld [vmem:[%s374 + $0x180] sm:$0xff]
        %v552 = vld [vmem:[%s374 + $0x188] sm:$0xff]
        %v553 = vld [vmem:[%s374 + $0x190] sm:$0xff]
        %v554 = vld [vmem:[%s374 + $0x198] sm:$0xff]
        %v555 = vld [vmem:[%s374 + $0x1a0] sm:$0xff]
        %v556 = vld [vmem:[%s374 + $0x1a8] sm:$0xff]
        %v557 = vld [vmem:[%s374 + $0x1b0] sm:$0xff]
        %v558 = vld [vmem:[%s374 + $0x1b8] sm:$0xff]
        %v559 = vld [vmem:[%s374 + $0x1c0] sm:$0xff]
        %v560 = vld [vmem:[%s374 + $0x1c8] sm:$0xff]
        %v561 = vld [vmem:[%s374 + $0x1d0] sm:$0xff]
        %v562 = vld [vmem:[%s374 + $0x1d8] sm:$0xff]
        %v563 = vld [vmem:[%s374 + $0x1e0] sm:$0xff]
        %v564 = vld [vmem:[%s374 + $0x1e8] sm:$0xff]
        %v565 = vld [vmem:[%s374 + $0x1f0] sm:$0xff]
        %v566 = vld [vmem:[%s374 + $0x1f8] sm:$0xff]
        %v567 = vld [vmem:[%s374 + $0x200] sm:$0xff]
        %v568 = vld [vmem:[%s374 + $0x208] sm:$0xff]
        %v569 = vld [vmem:[%s374 + $0x210] sm:$0xff]
        %v570 = vld [vmem:[%s374 + $0x218] sm:$0xff]
        %v571 = vld [vmem:[%s374 + $0x220] sm:$0xff]
        %v572 = vld [vmem:[%s374 + $0x228] sm:$0xff]
        %v573 = vld [vmem:[%s374 + $0x230] sm:$0xff]
        %v574 = vld [vmem:[%s374 + $0x238] sm:$0xff]
        %v575 = vld [vmem:[%s374 + $0x240] sm:$0xff]
        %v576 = vld [vmem:[%s374 + $0x248] sm:$0xff]
        %v577 = vld [vmem:[%s374 + $0x250] sm:$0xff]
        %v578 = vld [vmem:[%s374 + $0x258] sm:$0xff]
        %v579 = vld [vmem:[%s374 + $0x260] sm:$0xff]
        %v580 = vld [vmem:[%s374 + $0x268] sm:$0xff]
        %v581 = vld [vmem:[%s374 + $0x270] sm:$0xff]
        %v582 = vld [vmem:[%s374 + $0x278] sm:$0xff]
        %v583 = vld [vmem:[%s374 + $0x280] sm:$0xff]
        %v584 = vld [vmem:[%s374 + $0x288] sm:$0xff]
        %v585 = vld [vmem:[%s374 + $0x290] sm:$0xff]
        %v586 = vld [vmem:[%s374 + $0x298] sm:$0xff]
        %v587 = vld [vmem:[%s374 + $0x2a0] sm:$0xff]
        %v588 = vld [vmem:[%s374 + $0x2a8] sm:$0xff]
        %v589 = vld [vmem:[%s374 + $0x2b0] sm:$0xff]
        %v590 = vld [vmem:[%s374 + $0x2b8] sm:$0xff]
        %v591 = vld [vmem:[%s374 + $0x2c0] sm:$0xff]
        %v592 = vld [vmem:[%s374 + $0x2c8] sm:$0xff]
        %v593 = vld [vmem:[%s374 + $0x2d0] sm:$0xff]
        %v594 = vld [vmem:[%s374 + $0x2d8] sm:$0xff]
        %v595 = vld [vmem:[%s374 + $0x2e0] sm:$0xff]
        %v596 = vld [vmem:[%s374 + $0x2e8] sm:$0xff]
        %v597 = vld [vmem:[%s374 + $0x2f0] sm:$0xff]
        %v598 = vld [vmem:[%s374 + $0x2f8] sm:$0xff]
        %v599 = vld [vmem:[%s374 + $0x300] sm:$0xff]
        %v600 = vld [vmem:[%s374 + $0x308] sm:$0xff]
        %v601 = vld [vmem:[%s374 + $0x310] sm:$0xff]
        %v602 = vld [vmem:[%s374 + $0x318] sm:$0xff]
        %v603 = vld [vmem:[%s374 + $0x320] sm:$0xff]
        %v604 = vld [vmem:[%s374 + $0x328] sm:$0xff]
        %v605 = vld [vmem:[%s374 + $0x330] sm:$0xff]
        %v606 = vld [vmem:[%s374 + $0x338] sm:$0xff]
        %v607 = vld [vmem:[%s374 + $0x340] sm:$0xff]
        %v608 = vld [vmem:[%s374 + $0x348] sm:$0xff]
        %v609 = vld [vmem:[%s374 + $0x350] sm:$0xff]
        %v610 = vld [vmem:[%s374 + $0x358] sm:$0xff]
        %v611 = vld [vmem:[%s374 + $0x360] sm:$0xff]
        %v612 = vld [vmem:[%s374 + $0x368] sm:$0xff]
        %v613 = vld [vmem:[%s374 + $0x370] sm:$0xff]
        %v614 = vld [vmem:[%s374 + $0x378] sm:$0xff]
        %v615 = vld [vmem:[%s374 + $0x380] sm:$0xff]
        %v616 = vld [vmem:[%s374 + $0x388] sm:$0xff]
        %v617 = vld [vmem:[%s374 + $0x390] sm:$0xff]
        %v618 = vld [vmem:[%s374 + $0x398] sm:$0xff]
        %v619 = vld [vmem:[%s374 + $0x3a0] sm:$0xff]
        %v620 = vld [vmem:[%s374 + $0x3a8] sm:$0xff]
        %v621 = vld [vmem:[%s374 + $0x3b0] sm:$0xff]
        %v622 = vld [vmem:[%s374 + $0x3b8] sm:$0xff]
        %v623 = vld [vmem:[%s374 + $0x3c0] sm:$0xff]
        %v624 = vld [vmem:[%s374 + $0x3c8] sm:$0xff]
        %v625 = vld [vmem:[%s374 + $0x3d0] sm:$0xff]
        %v626 = vld [vmem:[%s374 + $0x3d8] sm:$0xff]
        %v627 = vld [vmem:[%s374 + $0x3e0] sm:$0xff]
        %v628 = vld [vmem:[%s374 + $0x3e8] sm:$0xff]
        %v629 = vld [vmem:[%s374 + $0x3f0] sm:$0xff]
        %v630 = vld [vmem:[%s374 + $0x3f8] sm:$0xff]
        %v631 = vld [vmem:[%s383] sm:$0xff]
        %v632 = vld [vmem:[%s383 + $0x8] sm:$0xff]
        %v633 = vld [vmem:[%s383 + $0x10] sm:$0xff]
        %v634 = vld [vmem:[%s383 + $0x18] sm:$0xff]
        %v635 = vld [vmem:[%s383 + $0x20] sm:$0xff]
        %v636 = vld [vmem:[%s383 + $0x28] sm:$0xff]
        %v637 = vld [vmem:[%s383 + $0x30] sm:$0xff]
        %v638 = vld [vmem:[%s383 + $0x38] sm:$0xff]
        %v639 = vld [vmem:[%s383 + $0x40] sm:$0xff]
        %v640 = vld [vmem:[%s383 + $0x48] sm:$0xff]
        %v641 = vld [vmem:[%s383 + $0x50] sm:$0xff]
        %v642 = vld [vmem:[%s383 + $0x58] sm:$0xff]
        %v643 = vld [vmem:[%s383 + $0x60] sm:$0xff]
        %v644 = vld [vmem:[%s383 + $0x68] sm:$0xff]
        %v645 = vld [vmem:[%s383 + $0x70] sm:$0xff]
        %v646 = vld [vmem:[%s383 + $0x78] sm:$0xff]
        %v647 = vld [vmem:[%s383 + $0x80] sm:$0xff]
        %v648 = vld [vmem:[%s383 + $0x88] sm:$0xff]
        %v649 = vld [vmem:[%s383 + $0x90] sm:$0xff]
        %v650 = vld [vmem:[%s383 + $0x98] sm:$0xff]
        %v651 = vld [vmem:[%s383 + $0xa0] sm:$0xff]
        %v652 = vld [vmem:[%s383 + $0xa8] sm:$0xff]
        %v653 = vld [vmem:[%s383 + $0xb0] sm:$0xff]
        %v654 = vld [vmem:[%s383 + $0xb8] sm:$0xff]
        %v655 = vld [vmem:[%s383 + $0xc0] sm:$0xff]
        %v656 = vld [vmem:[%s383 + $0xc8] sm:$0xff]
        %v657 = vld [vmem:[%s383 + $0xd0] sm:$0xff]
        %v658 = vld [vmem:[%s383 + $0xd8] sm:$0xff]
        %v659 = vld [vmem:[%s383 + $0xe0] sm:$0xff]
        %v660 = vld [vmem:[%s383 + $0xe8] sm:$0xff]
        %v661 = vld [vmem:[%s383 + $0xf0] sm:$0xff]
        %v662 = vld [vmem:[%s383 + $0xf8] sm:$0xff]
        %v663 = vld [vmem:[%s383 + $0x100] sm:$0xff]
        %v664 = vld [vmem:[%s383 + $0x108] sm:$0xff]
        %v665 = vld [vmem:[%s383 + $0x110] sm:$0xff]
        %v666 = vld [vmem:[%s383 + $0x118] sm:$0xff]
        %v667 = vld [vmem:[%s383 + $0x120] sm:$0xff]
        %v668 = vld [vmem:[%s383 + $0x128] sm:$0xff]
        %v669 = vld [vmem:[%s383 + $0x130] sm:$0xff]
        %v670 = vld [vmem:[%s383 + $0x138] sm:$0xff]
        %v671 = vld [vmem:[%s383 + $0x140] sm:$0xff]
        %v672 = vld [vmem:[%s383 + $0x148] sm:$0xff]
        %v673 = vld [vmem:[%s383 + $0x150] sm:$0xff]
        %v674 = vld [vmem:[%s383 + $0x158] sm:$0xff]
        %v675 = vld [vmem:[%s383 + $0x160] sm:$0xff]
        %v676 = vld [vmem:[%s383 + $0x168] sm:$0xff]
        %v677 = vld [vmem:[%s383 + $0x170] sm:$0xff]
        %v678 = vld [vmem:[%s383 + $0x178] sm:$0xff]
        %v679 = vld [vmem:[%s383 + $0x180] sm:$0xff]
        %v680 = vld [vmem:[%s383 + $0x188] sm:$0xff]
        %v681 = vld [vmem:[%s383 + $0x190] sm:$0xff]
        %v682 = vld [vmem:[%s383 + $0x198] sm:$0xff]
        %v683 = vld [vmem:[%s383 + $0x1a0] sm:$0xff]
        %v684 = vld [vmem:[%s383 + $0x1a8] sm:$0xff]
        %v685 = vld [vmem:[%s383 + $0x1b0] sm:$0xff]
        %v686 = vld [vmem:[%s383 + $0x1b8] sm:$0xff]
        %v687 = vld [vmem:[%s383 + $0x1c0] sm:$0xff]
        %v688 = vld [vmem:[%s383 + $0x1c8] sm:$0xff]
        %v689 = vld [vmem:[%s383 + $0x1d0] sm:$0xff]
        %v690 = vld [vmem:[%s383 + $0x1d8] sm:$0xff]
        %v691 = vld [vmem:[%s383 + $0x1e0] sm:$0xff]
        %v692 = vld [vmem:[%s383 + $0x1e8] sm:$0xff]
        %v693 = vld [vmem:[%s383 + $0x1f0] sm:$0xff]
        %v694 = vld [vmem:[%s383 + $0x1f8] sm:$0xff]
        %v695 = vld [vmem:[%s383 + $0x200] sm:$0xff]
        %v696 = vld [vmem:[%s383 + $0x208] sm:$0xff]
        %v697 = vld [vmem:[%s383 + $0x210] sm:$0xff]
        %v698 = vld [vmem:[%s383 + $0x218] sm:$0xff]
        %v699 = vld [vmem:[%s383 + $0x220] sm:$0xff]
        %v700 = vld [vmem:[%s383 + $0x228] sm:$0xff]
        %v701 = vld [vmem:[%s383 + $0x230] sm:$0xff]
        %v702 = vld [vmem:[%s383 + $0x238] sm:$0xff]
        %v703 = vld [vmem:[%s383 + $0x240] sm:$0xff]
        %v704 = vld [vmem:[%s383 + $0x248] sm:$0xff]
        %v705 = vld [vmem:[%s383 + $0x250] sm:$0xff]
        %v706 = vld [vmem:[%s383 + $0x258] sm:$0xff]
        %v707 = vld [vmem:[%s383 + $0x260] sm:$0xff]
        %v708 = vld [vmem:[%s383 + $0x268] sm:$0xff]
        %v709 = vld [vmem:[%s383 + $0x270] sm:$0xff]
        %v710 = vld [vmem:[%s383 + $0x278] sm:$0xff]
        %v711 = vld [vmem:[%s383 + $0x280] sm:$0xff]
        %v712 = vld [vmem:[%s383 + $0x288] sm:$0xff]
        %v713 = vld [vmem:[%s383 + $0x290] sm:$0xff]
        %v714 = vld [vmem:[%s383 + $0x298] sm:$0xff]
        %v715 = vld [vmem:[%s383 + $0x2a0] sm:$0xff]
        %v716 = vld [vmem:[%s383 + $0x2a8] sm:$0xff]
        %v717 = vld [vmem:[%s383 + $0x2b0] sm:$0xff]
        %v718 = vld [vmem:[%s383 + $0x2b8] sm:$0xff]
        %v719 = vld [vmem:[%s383 + $0x2c0] sm:$0xff]
        %v720 = vld [vmem:[%s383 + $0x2c8] sm:$0xff]
        %v721 = vld [vmem:[%s383 + $0x2d0] sm:$0xff]
        %v722 = vld [vmem:[%s383 + $0x2d8] sm:$0xff]
        %v723 = vld [vmem:[%s383 + $0x2e0] sm:$0xff]
        %v724 = vld [vmem:[%s383 + $0x2e8] sm:$0xff]
        %v725 = vld [vmem:[%s383 + $0x2f0] sm:$0xff]
        %v726 = vld [vmem:[%s383 + $0x2f8] sm:$0xff]
        %v727 = vld [vmem:[%s383 + $0x300] sm:$0xff]
        %v728 = vld [vmem:[%s383 + $0x308] sm:$0xff]
        %v729 = vld [vmem:[%s383 + $0x310] sm:$0xff]
        %v730 = vld [vmem:[%s383 + $0x318] sm:$0xff]
        %v731 = vld [vmem:[%s383 + $0x320] sm:$0xff]
        %v732 = vld [vmem:[%s383 + $0x328] sm:$0xff]
        %v733 = vld [vmem:[%s383 + $0x330] sm:$0xff]
        %v734 = vld [vmem:[%s383 + $0x338] sm:$0xff]
        %v735 = vld [vmem:[%s383 + $0x340] sm:$0xff]
        %v736 = vld [vmem:[%s383 + $0x348] sm:$0xff]
        %v737 = vld [vmem:[%s383 + $0x350] sm:$0xff]
        %v738 = vld [vmem:[%s383 + $0x358] sm:$0xff]
        %v739 = vld [vmem:[%s383 + $0x360] sm:$0xff]
        %v740 = vld [vmem:[%s383 + $0x368] sm:$0xff]
        %v741 = vld [vmem:[%s383 + $0x370] sm:$0xff]
        %v742 = vld [vmem:[%s383 + $0x378] sm:$0xff]
        %v743 = vld [vmem:[%s383 + $0x380] sm:$0xff]
        %v744 = vld [vmem:[%s383 + $0x388] sm:$0xff]
        %v745 = vld [vmem:[%s383 + $0x390] sm:$0xff]
        %v746 = vld [vmem:[%s383 + $0x398] sm:$0xff]
        %v747 = vld [vmem:[%s383 + $0x3a0] sm:$0xff]
        %v748 = vld [vmem:[%s383 + $0x3a8] sm:$0xff]
        %v749 = vld [vmem:[%s383 + $0x3b0] sm:$0xff]
        %v750 = vld [vmem:[%s383 + $0x3b8] sm:$0xff]
        %v751 = vld [vmem:[%s383 + $0x3c0] sm:$0xff]
        %v752 = vld [vmem:[%s383 + $0x3c8] sm:$0xff]
        %v753 = vld [vmem:[%s383 + $0x3d0] sm:$0xff]
        %v754 = vld [vmem:[%s383 + $0x3d8] sm:$0xff]
        %v755 = vld [vmem:[%s383 + $0x3e0] sm:$0xff]
        %v756 = vld [vmem:[%s383 + $0x3e8] sm:$0xff]
        %v757 = vld [vmem:[%s383 + $0x3f0] sm:$0xff]
        %v758 = vld [vmem:[%s383 + $0x3f8] sm:$0xff]
        %759 = vmatprep.subr.mxu0 %v632
        %760 = vmatpush1.xpose.msra.mxu0 %v631
        %761 = vmatprep.subr.mxu0 %v636
        %762 = vmatpush1.xpose.msra.mxu0 %v635
        %763 = vmatprep.subr.mxu0 %v640
        %764 = vmatpush1.xpose.msra.mxu0 %v639
        %765 = vmatprep.subr.mxu0 %v644
        %766 = vmatpush1.xpose.msra.mxu0 %v643
        %767 = vmatprep.subr.mxu0 %v648
        %768 = vmatpush1.xpose.msra.mxu0 %v647
        %769 = vmatprep.subr.mxu0 %v652
        %770 = vmatpush1.xpose.msra.mxu0 %v651
        %771 = vmatprep.subr.mxu0 %v656
        %772 = vmatpush1.xpose.msra.mxu0 %v655
        %773 = vmatprep.subr.mxu0 %v660
        %774 = vmatpush1.xpose.msra.mxu0 %v659
        %775 = vmatprep.subr.mxu0 %v664
        %776 = vmatpush1.xpose.msra.mxu0 %v663
        %777 = vmatprep.subr.mxu0 %v668
        %778 = vmatpush1.xpose.msra.mxu0 %v667
        %779 = vmatprep.subr.mxu0 %v672
        %780 = vmatpush1.xpose.msra.mxu0 %v671
        %781 = vmatprep.subr.mxu0 %v676
        %782 = vmatpush1.xpose.msra.mxu0 %v675
        %783 = vmatprep.subr.mxu0 %v680
        %784 = vmatpush1.xpose.msra.mxu0 %v679
        %785 = vmatprep.subr.mxu0 %v684
        %786 = vmatpush1.xpose.msra.mxu0 %v683
        %787 = vmatprep.subr.mxu0 %v688
        %788 = vmatpush1.xpose.msra.mxu0 %v687
        %789 = vmatprep.subr.mxu0 %v692
        %790 = vmatpush1.xpose.msra.mxu0 %v691
        %791 = vmatprep.subr.mxu0 %v696
        %792 = vmatpush1.xpose.msra.mxu0 %v695
        %793 = vmatprep.subr.mxu0 %v700
        %794 = vmatpush1.xpose.msra.mxu0 %v699
        %795 = vmatprep.subr.mxu0 %v704
        %796 = vmatpush1.xpose.msra.mxu0 %v703
        %797 = vmatprep.subr.mxu0 %v708
        %798 = vmatpush1.xpose.msra.mxu0 %v707
        %799 = vmatprep.subr.mxu0 %v712
        %800 = vmatpush1.xpose.msra.mxu0 %v711
        %801 = vmatprep.subr.mxu0 %v716
        %802 = vmatpush1.xpose.msra.mxu0 %v715
        %803 = vmatprep.subr.mxu0 %v720
        %804 = vmatpush1.xpose.msra.mxu0 %v719
        %805 = vmatprep.subr.mxu0 %v724
        %806 = vmatpush1.xpose.msra.mxu0 %v723
        %807 = vmatprep.subr.mxu0 %v728
        %808 = vmatpush1.xpose.msra.mxu0 %v727
        %809 = vmatprep.subr.mxu0 %v732
        %810 = vmatpush1.xpose.msra.mxu0 %v731
        %811 = vmatprep.subr.mxu0 %v736
        %812 = vmatpush1.xpose.msra.mxu0 %v735
        %813 = vmatprep.subr.mxu0 %v740
        %814 = vmatpush1.xpose.msra.mxu0 %v739
        %815 = vmatprep.subr.mxu0 %v744
        %816 = vmatpush1.xpose.msra.mxu0 %v743
        %817 = vmatprep.subr.mxu0 %v748
        %818 = vmatpush1.xpose.msra.mxu0 %v747
        %819 = vmatprep.subr.mxu0 %v752
        %820 = vmatpush1.xpose.msra.mxu0 %v751
        %821 = vmatprep.subr.mxu0 %v756
        %822 = vmatpush1.xpose.msra.mxu0 %v755
        %823 = vmatprep.mubr.f32.mxu0 %v500
        %824 = vmatmul.mubr.f32.gmra.mrb[0].mxu0 %v499
        %v825 = vpop.f32.mrb[0].mxu0
        %v826 = vadd.f32 0.0, %v825
        %v827 = vpop.f32.mrb[0].mxu0
        %v828 = vadd.f32 0.0, %v827
        %829 = vdwg.mxu0
        %830 = vmatprep.subr.mxu0 %v634
        %831 = vmatpush1.xpose.msra.mxu0 %v633
        %832 = vmatprep.subr.mxu0 %v638
        %833 = vmatpush1.xpose.msra.mxu0 %v637
        %834 = vmatprep.subr.mxu0 %v642
        %835 = vmatpush1.xpose.msra.mxu0 %v641
        %836 = vmatprep.subr.mxu0 %v646
        %837 = vmatpush1.xpose.msra.mxu0 %v645
        %838 = vmatprep.subr.mxu0 %v650
        %839 = vmatpush1.xpose.msra.mxu0 %v649
        %840 = vmatprep.subr.mxu0 %v654
        %841 = vmatpush1.xpose.msra.mxu0 %v653
        %842 = vmatprep.subr.mxu0 %v658
        %843 = vmatpush1.xpose.msra.mxu0 %v657
        %844 = vmatprep.subr.mxu0 %v662
        %845 = vmatpush1.xpose.msra.mxu0 %v661
        %846 = vmatprep.subr.mxu0 %v666
        %847 = vmatpush1.xpose.msra.mxu0 %v665
        %848 = vmatprep.subr.mxu0 %v670
        %849 = vmatpush1.xpose.msra.mxu0 %v669
        %850 = vmatprep.subr.mxu0 %v674
        %851 = vmatpush1.xpose.msra.mxu0 %v673
        %852 = vmatprep.subr.mxu0 %v678
        %853 = vmatpush1.xpose.msra.mxu0 %v677
        %854 = vmatprep.subr.mxu0 %v682
        %855 = vmatpush1.xpose.msra.mxu0 %v681
        %856 = vmatprep.subr.mxu0 %v686
        %857 = vmatpush1.xpose.msra.mxu0 %v685
        %858 = vmatprep.subr.mxu0 %v690
        %859 = vmatpush1.xpose.msra.mxu0 %v689
        %860 = vmatprep.subr.mxu0 %v694
        %861 = vmatpush1.xpose.msra.mxu0 %v693
        %862 = vmatprep.subr.mxu0 %v698
        %863 = vmatpush1.xpose.msra.mxu0 %v697
        %864 = vmatprep.subr.mxu0 %v702
        %865 = vmatpush1.xpose.msra.mxu0 %v701
        %866 = vmatprep.subr.mxu0 %v706
        %867 = vmatpush1.xpose.msra.mxu0 %v705
        %868 = vmatprep.subr.mxu0 %v710
        %869 = vmatpush1.xpose.msra.mxu0 %v709
        %870 = vmatprep.subr.mxu0 %v714
        %871 = vmatpush1.xpose.msra.mxu0 %v713
        %872 = vmatprep.subr.mxu0 %v718
        %873 = vmatpush1.xpose.msra.mxu0 %v717
        %874 = vmatprep.subr.mxu0 %v722
        %875 = vmatpush1.xpose.msra.mxu0 %v721
        %876 = vmatprep.subr.mxu0 %v726
        %877 = vmatpush1.xpose.msra.mxu0 %v725
        %878 = vmatprep.subr.mxu0 %v730
        %879 = vmatpush1.xpose.msra.mxu0 %v729
        %880 = vmatprep.subr.mxu0 %v734
        %881 = vmatpush1.xpose.msra.mxu0 %v733
        %882 = vmatprep.subr.mxu0 %v738
        %883 = vmatpush1.xpose.msra.mxu0 %v737
        %884 = vmatprep.subr.mxu0 %v742
        %885 = vmatpush1.xpose.msra.mxu0 %v741
        %886 = vmatprep.subr.mxu0 %v746
        %887 = vmatpush1.xpose.msra.mxu0 %v745
        %888 = vmatprep.subr.mxu0 %v750
        %889 = vmatpush1.xpose.msra.mxu0 %v749
        %890 = vmatprep.subr.mxu0 %v754
        %891 = vmatpush1.xpose.msra.mxu0 %v753
        %892 = vmatprep.subr.mxu0 %v758
        %893 = vmatpush1.xpose.msra.mxu0 %v757
        %894 = vmatprep.mubr.f32.mxu0 %v502
        %895 = vmatmul.mubr.f32.gmra.mrb[0].mxu0 %v501
        %v896 = vpop.f32.mrb[0].mxu0
        %v897 = vadd.f32 %v826, %v896
        %v898 = vpop.f32.mrb[0].mxu0
        %v899 = vadd.f32 %v828, %v898
        %900 = vdwg.mxu0
        %v901 = vld [vmem:[#allocation2] sm:$0xff]
        %v902 = vld [vmem:[#allocation2 + $0x8] sm:$0xff]
        %v903 = vld [vmem:[%s401] sm:$0x3]
        %v905 = vlaneseq
        %v906 = vshrl.u32 %v905, 7
        %v907 = vsub.s32 0, %v906
        %v908 = vrot.slane %v903, %v907
        %v909 = vlaneseq
        %v910 = vshrl.u32 %v909, 7
        %v911 = vsub.s32 1, %v910
        %v912 = vrot.slane %v903, %v911
        %v915 = vmul.f32 %v897, %v908
        %v916 = vmul.f32 %v899, %v912
        %917 = vmatprep.subr.mxu0 %v504
        %918 = vmatpush1.xpose.msra.mxu0 %v503
        %919 = vmatprep.subr.mxu0 %v508
        %920 = vmatpush1.xpose.msra.mxu0 %v507
        %921 = vmatprep.subr.mxu0 %v512
        %922 = vmatpush1.xpose.msra.mxu0 %v511
        %923 = vmatprep.subr.mxu0 %v516
        %924 = vmatpush1.xpose.msra.mxu0 %v515
        %925 = vmatprep.subr.mxu0 %v520
        %926 = vmatpush1.xpose.msra.mxu0 %v519
        %927 = vmatprep.subr.mxu0 %v524
        %928 = vmatpush1.xpose.msra.mxu0 %v523
        %929 = vmatprep.subr.mxu0 %v528
        %930 = vmatpush1.xpose.msra.mxu0 %v527
        %931 = vmatprep.subr.mxu0 %v532
        %932 = vmatpush1.xpose.msra.mxu0 %v531
        %933 = vmatprep.subr.mxu0 %v536
        %934 = vmatpush1.xpose.msra.mxu0 %v535
        %935 = vmatprep.subr.mxu0 %v540
        %936 = vmatpush1.xpose.msra.mxu0 %v539
        %937 = vmatprep.subr.mxu0 %v544
        %938 = vmatpush1.xpose.msra.mxu0 %v543
        %939 = vmatprep.subr.mxu0 %v548
        %940 = vmatpush1.xpose.msra.mxu0 %v547
        %941 = vmatprep.subr.mxu0 %v552
        %942 = vmatpush1.xpose.msra.mxu0 %v551
        %943 = vmatprep.subr.mxu0 %v556
        %944 = vmatpush1.xpose.msra.mxu0 %v555
        %945 = vmatprep.subr.mxu0 %v560
        %946 = vmatpush1.xpose.msra.mxu0 %v559
        %947 = vmatprep.subr.mxu0 %v564
        %948 = vmatpush1.xpose.msra.mxu0 %v563
        %949 = vmatprep.subr.mxu0 %v568
        %950 = vmatpush1.xpose.msra.mxu0 %v567
        %951 = vmatprep.subr.mxu0 %v572
        %952 = vmatpush1.xpose.msra.mxu0 %v571
        %953 = vmatprep.subr.mxu0 %v576
        %954 = vmatpush1.xpose.msra.mxu0 %v575
        %955 = vmatprep.subr.mxu0 %v580
        %956 = vmatpush1.xpose.msra.mxu0 %v579
        %957 = vmatprep.subr.mxu0 %v584
        %958 = vmatpush1.xpose.msra.mxu0 %v583
        %959 = vmatprep.subr.mxu0 %v588
        %960 = vmatpush1.xpose.msra.mxu0 %v587
        %961 = vmatprep.subr.mxu0 %v592
        %962 = vmatpush1.xpose.msra.mxu0 %v591
        %963 = vmatprep.subr.mxu0 %v596
        %964 = vmatpush1.xpose.msra.mxu0 %v595
        %965 = vmatprep.subr.mxu0 %v600
        %966 = vmatpush1.xpose.msra.mxu0 %v599
        %967 = vmatprep.subr.mxu0 %v604
        %968 = vmatpush1.xpose.msra.mxu0 %v603
        %969 = vmatprep.subr.mxu0 %v608
        %970 = vmatpush1.xpose.msra.mxu0 %v607
        %971 = vmatprep.subr.mxu0 %v612
        %972 = vmatpush1.xpose.msra.mxu0 %v611
        %973 = vmatprep.subr.mxu0 %v616
        %974 = vmatpush1.xpose.msra.mxu0 %v615
        %975 = vmatprep.subr.mxu0 %v620
        %976 = vmatpush1.xpose.msra.mxu0 %v619
        %977 = vmatprep.subr.mxu0 %v624
        %978 = vmatpush1.xpose.msra.mxu0 %v623
        %979 = vmatprep.subr.mxu0 %v628
        %980 = vmatpush1.xpose.msra.mxu0 %v627
        %981 = vmatprep.mubr.f32.mxu0 %v474
        %982 = vmatmul.mubr.f32.gmra.mrb[0].mxu0 %v473
        %v983 = vpop.f32.mrb[0].mxu0
        %v984 = vadd.f32 %v915, %v983
        %v985 = vpop.f32.mrb[0].mxu0
        %v986 = vadd.f32 %v916, %v985
        %987 = vdwg.mxu0
        %988 = vmatprep.subr.mxu0 %v506
        %989 = vmatpush1.xpose.msra.mxu0 %v505
        %990 = vmatprep.subr.mxu0 %v510
        %991 = vmatpush1.xpose.msra.mxu0 %v509
        %992 = vmatprep.subr.mxu0 %v514
        %993 = vmatpush1.xpose.msra.mxu0 %v513
        %994 = vmatprep.subr.mxu0 %v518
        %995 = vmatpush1.xpose.msra.mxu0 %v517
        %996 = vmatprep.subr.mxu0 %v522
        %997 = vmatpush1.xpose.msra.mxu0 %v521
        %998 = vmatprep.subr.mxu0 %v526
        %999 = vmatpush1.xpose.msra.mxu0 %v525
        %1000 = vmatprep.subr.mxu0 %v530
        %1001 = vmatpush1.xpose.msra.mxu0 %v529
        %1002 = vmatprep.subr.mxu0 %v534
        %1003 = vmatpush1.xpose.msra.mxu0 %v533
        %1004 = vmatprep.subr.mxu0 %v538
        %1005 = vmatpush1.xpose.msra.mxu0 %v537
        %1006 = vmatprep.subr.mxu0 %v542
        %1007 = vmatpush1.xpose.msra.mxu0 %v541
        %1008 = vmatprep.subr.mxu0 %v546
        %1009 = vmatpush1.xpose.msra.mxu0 %v545
        %1010 = vmatprep.subr.mxu0 %v550
        %1011 = vmatpush1.xpose.msra.mxu0 %v549
        %1012 = vmatprep.subr.mxu0 %v554
        %1013 = vmatpush1.xpose.msra.mxu0 %v553
        %1014 = vmatprep.subr.mxu0 %v558
        %1015 = vmatpush1.xpose.msra.mxu0 %v557
        %1016 = vmatprep.subr.mxu0 %v562
        %1017 = vmatpush1.xpose.msra.mxu0 %v561
        %1018 = vmatprep.subr.mxu0 %v566
        %1019 = vmatpush1.xpose.msra.mxu0 %v565
        %1020 = vmatprep.subr.mxu0 %v570
        %1021 = vmatpush1.xpose.msra.mxu0 %v569
        %1022 = vmatprep.subr.mxu0 %v574
        %1023 = vmatpush1.xpose.msra.mxu0 %v573
        %1024 = vmatprep.subr.mxu0 %v578
        %1025 = vmatpush1.xpose.msra.mxu0 %v577
        %1026 = vmatprep.subr.mxu0 %v582
        %1027 = vmatpush1.xpose.msra.mxu0 %v581
        %1028 = vmatprep.subr.mxu0 %v586
        %1029 = vmatpush1.xpose.msra.mxu0 %v585
        %1030 = vmatprep.subr.mxu0 %v590
        %1031 = vmatpush1.xpose.msra.mxu0 %v589
        %1032 = vmatprep.subr.mxu0 %v594
        %1033 = vmatpush1.xpose.msra.mxu0 %v593
        %1034 = vmatprep.subr.mxu0 %v598
        %1035 = vmatpush1.xpose.msra.mxu0 %v597
        %1036 = vmatprep.subr.mxu0 %v602
        %1037 = vmatpush1.xpose.msra.mxu0 %v601
        %1038 = vmatprep.subr.mxu0 %v606
        %1039 = vmatpush1.xpose.msra.mxu0 %v605
        %1040 = vmatprep.subr.mxu0 %v610
        %1041 = vmatpush1.xpose.msra.mxu0 %v609
        %1042 = vmatprep.subr.mxu0 %v614
        %1043 = vmatpush1.xpose.msra.mxu0 %v613
        %1044 = vmatprep.subr.mxu0 %v618
        %1045 = vmatpush1.xpose.msra.mxu0 %v617
        %1046 = vmatprep.subr.mxu0 %v622
        %1047 = vmatpush1.xpose.msra.mxu0 %v621
        %1048 = vmatprep.subr.mxu0 %v626
        %1049 = vmatpush1.xpose.msra.mxu0 %v625
        %1050 = vmatprep.subr.mxu0 %v630
        %1051 = vmatpush1.xpose.msra.mxu0 %v629
        %1052 = vmatprep.mubr.f32.mxu0 %v476
        %1053 = vmatmul.mubr.f32.gmra.mrb[0].mxu0 %v475
        %v1054 = vpop.f32.mrb[0].mxu0
        %v1055 = vadd.f32 %v984, %v1054
        %v1056 = vpop.f32.mrb[0].mxu0
        %v1057 = vadd.f32 %v986, %v1056
        %1058 = vdwg.mxu0
        %v1059 = vadd.f32 %v901, %v1055
        %v1060 = vadd.f32 %v902, %v1057
        %1061 = vst [vmem:[#allocation2] sm:$0xff] %v1059
        %1062 = vst [vmem:[#allocation2 + $0x8] sm:$0xff] %v1060
        %p1063 = scmp.eq.s32.totalorder %s34, 1
        // Predicated region
        $region69: #{noisy_linear_forward.1} parent=43 // pred_check
          %p1064 = pneg %p1063
        $region70: #{noisy_linear_forward.1} parent=43 // pred_check_branch
          %1066 = sbr.rel (%p1064) target = $region72
        $region71: #{noisy_linear_forward.1} parent=43 // pred_region
          %v1067 = vld [vmem:[#allocation2] sm:$0xff]
          %v1068 = vld [vmem:[#allocation2 + $0x8] sm:$0xff]
          %v1069 = vld [vmem:[%s464] sm:$0x3]
          %v1071 = vlaneseq
          %v1072 = vshrl.u32 %v1071, 7
          %v1073 = vsub.s32 0, %v1072
          %v1074 = vrot.slane %v1069, %v1073
          %v1075 = vlaneseq
          %v1076 = vshrl.u32 %v1075, 7
          %v1077 = vsub.s32 1, %v1076
          %v1078 = vrot.slane %v1069, %v1077
          %v1081 = vadd.f32 %v1067, %v1074
          %v1082 = vadd.f32 %v1068, %v1078
          %1083 = vst [vmem:[%s453] sm:$0xff] %v1081
          %1084 = vst [vmem:[%s453 + $0x8] sm:$0xff] %v1082
        $region72: #{noisy_linear_forward.1} parent=43 // pred_fallthru
          _
        %s1085 = sand.u32 %s209, 1
        %s1086 = scalar_lea.sflag [#allocation5], %s1085
        %s1087 = sand.u32 %s209, 1
        %s1088 = smul.addr %s1087, 16
        %s1089 = scalar_lea.vmem [#allocation12], %s1088
        // Predicated region
        $region73: #{noisy_linear_forward.1} parent=43 // pred_check
          %p1090 = pneg %p219
        $region74: #{noisy_linear_forward.1} parent=43 // pred_check_branch
          %1092 = sbr.rel (%p1090) target = $region76
        $region75: #{noisy_linear_forward.1} parent=43 // pred_region
          %s1093 = smul.u32 2, %s33
          %s1095 = ssub.s32 256, 256
          %1096 = vsyncadd %s1086, %s1095
          %s1097 = smul.addr %s1093, 128
          %s1098 = scalar_lea.hbm %s6, %s1097
          %s1100 = sshll.u32 %s1089, 4
          %s1101 = int_to_ptr.vmem [resolvable:$true] %s1100
          %1103 = dma.vmem_to_hbm [thread:$0]  %s1101, 256, %s1098, %s1086
        $region76: #{noisy_linear_forward.1} parent=43 // pred_fallthru
          _
      $region44: #{noisy_linear_forward.1} parent=5 // pred_fallthru
        _
      %p1104 = scmp.le.s32.totalorder 2, %s24
      // Predicated region
      $region77: #{noisy_linear_forward.1} parent=5 // pred_check
        %p1105 = pneg %p1104
      $region78: #{noisy_linear_forward.1} parent=5 // pred_check_branch
        %1107 = sbr.rel (%p1105) target = $region80
      $region79: #{noisy_linear_forward.1} parent=5 // pred_region
        %s1108 = ssub.s32 %s24, 2
        // Predicated region
        $region81: #{noisy_linear_forward.1} parent=79 // pred_check
          %p1109 = pneg %p225
        $region82: #{noisy_linear_forward.1} parent=79 // pred_check_branch
          %1111 = sbr.rel (%p1109) target = $region84
        $region83: #{noisy_linear_forward.1} parent=79 // pred_region
          %s1112 = sand.u32 %s210, 1
          %s1113 = scalar_lea.sflag [#allocation5], %s1112
          %s1114 = sand.u32 %s210, 1
          %s1115 = smul.addr %s1114, 16
          %s1116 = scalar_lea.vmem [#allocation12], %s1115
          %1117 = dma.done %s1113, 256
        $region84: #{noisy_linear_forward.1} parent=79 // pred_fallthru
          _
      $region80: #{noisy_linear_forward.1} parent=5 // pred_fallthru
        _
    $region6: #{noisy_linear_forward.1} parent=1 // loop_footer
      %s28 = sadd.s32 1, %s24
    $region7: #{noisy_linear_forward.1} parent=1 // loop_footer_branch
      %23 = sbr.rel target = $region3
    $region8: #{noisy_linear_forward.1} parent=1 // loop_exit
      _
    %1118 = vsyncpa [#allocation4], 1
    %s1119 = scalar_lea.sflag [#allocation4], 1
    %1120 = vsyncpa %s1119, 1
    %1121 = vsyncpa [#allocation7], 1
    %s1122 = scalar_lea.sflag [#allocation7], 1
    %1123 = vsyncpa %s1122, 1
    %1124 = vsyncpa [#allocation10], 1
    %s1125 = scalar_lea.sflag [#allocation10], 1
    %1126 = vsyncpa %s1125, 1
    %1127 = vsyncpa [#allocation5], 1
    %s1128 = scalar_lea.sflag [#allocation5], 1
    %1129 = vsyncpa %s1128, 1

</llo_original>
